<compile_context>
chip_gen: v7x
topology: tpu7x:2x2x1
jax: 0.10.0
libtpu: 0.0.40
codegen_flags: <defaults>
</compile_context>

<pallas_src>
import functools

import jax
import jax.numpy as jnp
from jax.experimental import pallas as pl
from jax.experimental.pallas import tpu as pltpu


# ----------------------------- BN statistics ---------------------------------

_ROW_TILE_CAP = 1024  # >=512 already reaches ~85% of HBM roofline for this reduction.


def _bn_stats_kernel(x_ref, sum_ref, sq_ref, *, rows, tm):
    """Accumulate per-lane sum and sum-of-squares over row tiles."""
    @pl.when(pl.program_id(0) == 0)
    def _():
        sum_ref[...] = jnp.zeros_like(sum_ref)
        sq_ref[...] = jnp.zeros_like(sq_ref)

    x = x_ref[...].astype(jnp.float32)
    if rows % tm:  # ragged tail: mask out-of-range rows of the last block
        r = pl.program_id(0) * tm + jax.lax.broadcasted_iota(jnp.int32, x.shape, 0)
        x = jnp.where(r < rows, x, 0.0)
    sum_ref[...] += jnp.sum(x, axis=0, keepdims=True)
    sq_ref[...] += jnp.sum(x * x, axis=0, keepdims=True)


def _channel_stats(x, c):
    """Per-channel biased mean/var (torch BN with track_running_stats=False).

    Works on any layout whose flattened minor axis has channel period `c`
    (true for NHWC and for the cell-grouped layout used below)."""
    total = x.size
    lanes = 128 if (total % 128 == 0 and 128 % c == 0) else c
    rows = total // lanes
    x2 = x.reshape(rows, lanes)
    tm = rows if rows <= _ROW_TILE_CAP else _ROW_TILE_CAP
    grid = pl.cdiv(rows, tm)

    kernel = functools.partial(_bn_stats_kernel, rows=rows, tm=tm)
    sums, sqs = pl.pallas_call(
        kernel,
        out_shape=(jax.ShapeDtypeStruct((1, lanes), jnp.float32),
                   jax.ShapeDtypeStruct((1, lanes), jnp.float32)),
        grid=(grid,),
        in_specs=[pl.BlockSpec((tm, lanes), lambda i: (i, 0))],
        out_specs=(pl.BlockSpec((1, lanes), lambda i: (0, 0)),
                   pl.BlockSpec((1, lanes), lambda i: (0, 0))),
        compiler_params=pltpu.CompilerParams(
            dimension_semantics=("arbitrary",),
            vmem_limit_bytes=32 * 1024 * 1024),
    )(x2)

    if lanes != c:
        sums = sums.reshape(lanes // c, c).sum(axis=0)
        sqs = sqs.reshape(lanes // c, c).sum(axis=0)
    else:
        sums = sums.reshape(c)
        sqs = sqs.reshape(c)
    count = total // c
    mean = sums / count
    var = jnp.maximum(sqs / count - mean * mean, 0.0)
    return mean, var


# ------------------- fused BN+ReLU+conv(+stats)(+residual) --------------------

def _scratch_groups(s, pad_scr, cin, cg):
    """Where each stride-phase group of the activation lands in the padded
    scratch: (row0, col0, dst_ch_lo, dst_ch_hi, src_ch_lo, src_ch_hi)."""
    if pad_scr % s == 0:
        off = pad_scr // s
        return ((off, off, 0, cg, 0, cg),)
    groups = []
    for up in range(s):
        ro, rp = (up + pad_scr) // s, (up + pad_scr) % s
        for uq in range(s):
            co, rq = (uq + pad_scr) // s, (uq + pad_scr) % s
            g_src, g_dst = up * s + uq, rp * s + rq
            groups.append((ro, co, g_dst * cin, (g_dst + 1) * cin,
                           g_src * cin, (g_src + 1) * cin))
    return tuple(groups)


def _repack_weights(weights, paddings, s, pad_scr, cin, dtype=jnp.bfloat16):
    """Fuse several HWIO conv weights (same stride / output size) into ONE
    (n_taps, s*s*cin, sum couts) bf16 slab: one deep matmul per scratch
    block-offset, with every conv's output channels concatenated on N."""
    couts = [w.shape[3] for w in weights]
    c_total = sum(couts)
    cg = s * s * cin
    entries, tap_set, col = [], set(), 0
    for w_hwio, pp in zip(weights, paddings):
        k = w_hwio.shape[0]
        d = pad_scr - pp  # tap shift inside the shared scratch
        for di in range(k):
            qi, rp = (di + d) // s, (di + d) % s
            for dj in range(k):
                qj, rq = (dj + d) // s, (dj + d) % s
                tap_set.add((qi, qj))
                entries.append(((qi, qj), rp * s + rq, col, w_hwio[di, dj]))
        col += w_hwio.shape[3]
    taps = tuple(sorted(tap_set))
    tap_idx = {t: i for i, t in enumerate(taps)}
    wp = jnp.zeros((len(taps), cg, c_total), jnp.float32)
    for (t, g, coff, mat) in entries:
        wp = wp.at[tap_idx[t], g * cin:(g + 1) * cin,
                   coff:coff + mat.shape[1]].set(mat)
    return wp.astype(dtype), taps


def _preact_conv_kernel(*refs, taps, groups, ho, wo, h_in, w_in,
                        out_scale, has_residual, stats_cout):
    """One batch element per grid step.

    refs = (x, bn_scale, bn_shift, w, [residual],
            out, [sum_partial, sq_partial], pad_scratch)
    """
    x_ref, scale_ref, shift_ref, w_ref = refs[:4]
    pos = 4
    res_ref = refs[pos] if has_residual else None
    pos += int(has_residual)
    out_ref = refs[pos]
    pos += 1
    if stats_cout:
        sum_ref, sq_ref = refs[pos], refs[pos + 1]
        pos += 2
    pad_ref = refs[pos]
    hb, wb, cg = pad_ref.shape

    # Fused BatchNorm apply + ReLU (scale/shift fold mean/var/gamma/beta).
    x = x_ref[0].astype(jnp.float32)                         # (h_in, w_in, cg)
    act = jnp.maximum(x * scale_ref[...] + shift_ref[...], 0.0)

    # Stage the zero-padded, phase-grouped activation in VMEM.  Only the border
    # strips outside each group's written window are memset (O(perimeter),
    # not O(area)); conv padding stays exactly 0 even though relu(shift) != 0.
    for (r0, c0, cs, ce, ss, se) in groups:
        nc = ce - cs
        if r0 > 0:
            pad_ref[0:r0, :, cs:ce] = jnp.zeros((r0, wb, nc), jnp.float32)
        if r0 + h_in < hb:
            pad_ref[r0 + h_in:hb, :, cs:ce] = jnp.zeros(
                (hb - r0 - h_in, wb, nc), jnp.float32)
        if c0 > 0:
            pad_ref[r0:r0 + h_in, 0:c0, cs:ce] = jnp.zeros(
                (h_in, c0, nc), jnp.float32)
        if c0 + w_in < wb:
            pad_ref[r0:r0 + h_in, c0 + w_in:wb, cs:ce] = jnp.zeros(
                (h_in, wb - c0 - w_in, nc), jnp.float32)
        pad_ref[r0:r0 + h_in, c0:c0 + w_in, cs:ce] = act[:, :, ss:se]

    # Block-offset matmuls on the MXU: bf16 x bf16 -> f32 accumulation (native
    # MXU path on all generations).  Weights stay resident in VMEM.
    c_total = out_ref.shape[-1]
    acc = jnp.zeros((ho * wo, c_total), jnp.float32)
    for t, (qi, qj) in enumerate(taps):
        patch = pad_ref[qi:qi + ho, qj:qj + wo, :]           # (ho, wo, cg)
        lhs = patch.reshape(ho * wo, cg).astype(jnp.bfloat16)
        acc = acc + jnp.dot(lhs, w_ref[t], preferred_element_type=jnp.float32)

    # Fused bn2 batch statistics of the first `stats_cout` output channels
    # (per-batch partials, reduced in the wrapper) -> no HBM re-read of h1.
    if stats_cout:
        h1 = acc[:, :stats_cout]
        sum_ref[...] = jnp.sum(h1, axis=0).reshape(1, 1, stats_cout)
        sq_ref[...] = jnp.sum(h1 * h1, axis=0).reshape(1, 1, stats_cout)

    if out_scale != 1.0:
        acc = acc * out_scale
    if has_residual:
        acc = acc + res_ref[0].astype(jnp.float32)
    out_ref[0] = acc.astype(out_ref.dtype)


def preact_fused_conv(x_g, cin, stride, mean, var, gamma, beta, weights,
                      paddings, out_scale=1.0, residual=None, stats_cout=0,
                      out_dtype=jnp.bfloat16, eps=1e-5):
    """relu(bn(x)) followed by one fused multi-conv matmul slab.

    x_g is the cell-grouped NHWC input (n, H/s, W/s, s*s*cin).  Returns
    (out4 (n, ho, wo, sum couts), sums, sqs) where the stats are per-batch
    partial sum / sum-of-squares of the first `stats_cout` output channels
    (None if stats_cout == 0).
    """
    n, h_in, w_in, cg = x_g.shape
    s = stride
    assert cg == s * s * cin

    # Fold BN batch stats + affine into per-channel scale/shift (f32).
    invstd = jax.lax.rsqrt(var.astype(jnp.float32) + eps)
    scale = gamma.astype(jnp.float32) * invstd
    shift = beta.astype(jnp.float32) - mean.astype(jnp.float32) * scale
    scale_g = jnp.tile(scale, s * s).reshape(1, cg)
    shift_g = jnp.tile(shift, s * s).reshape(1, cg)

    h, w = h_in * s, w_in * s
    ks = [wt.shape[0] for wt in weights]
    couts = [wt.shape[3] for wt in weights]
    c_total = sum(couts)
    pad_scr = max(paddings)
    ho = (h + 2 * paddings[0] - ks[0]) // s + 1
    wo = (w + 2 * paddings[0] - ks[0]) // s + 1
    for kk, pp in zip(ks, paddings):
        if (h + 2 * pp - kk) // s + 1 != ho or (w + 2 * pp - kk) // s + 1 != wo:
            raise ValueError("fused convs must share the output size")

    w_comb, taps = _repack_weights(weights, paddings, s, pad_scr, cin)
    q_max = max(max(q) for q in taps)
    hb = max(h_in + (s - 1 + pad_scr) // s, ho + q_max)
    wb = max(w_in + (s - 1 + pad_scr) // s, wo + q_max)
    groups = _scratch_groups(s, pad_scr, cin, cg)

    ins = [x_g, scale_g, shift_g, w_comb]
    in_specs = [
        pl.BlockSpec((1, h_in, w_in, cg), lambda i: (i, 0, 0, 0)),
        pl.BlockSpec((1, cg), lambda i: (0, 0)),
        pl.BlockSpec((1, cg), lambda i: (0, 0)),
        # Full weight slab resident across the grid (constant block index).
        pl.BlockSpec(w_comb.shape, lambda i: (0, 0, 0)),
    ]
    has_res = residual is not None
    if has_res:
        assert residual.shape[-1] == c_total
        ins.append(residual.reshape(n, ho * wo, c_total))
        in_specs.append(pl.BlockSpec((1, ho * wo, c_total), lambda i: (i, 0, 0)))

    out_shapes = [jax.ShapeDtypeStruct((n, ho * wo, c_total), out_dtype)]
    out_specs = [pl.BlockSpec((1, ho * wo, c_total), lambda i: (i, 0, 0))]
    if stats_cout:
        out_shapes += [jax.ShapeDtypeStruct((n, 1, stats_cout), jnp.float32)] * 2
        out_specs += [pl.BlockSpec((1, 1, stats_cout), lambda i: (i, 0, 0))] * 2

    kernel = functools.partial(
        _preact_conv_kernel, taps=taps, groups=groups, ho=ho, wo=wo,
        h_in=h_in, w_in=w_in, out_scale=float(out_scale),
        has_residual=has_res, stats_cout=int(stats_cout))

    outs = pl.pallas_call(
        kernel,
        out_shape=tuple(out_shapes),
        grid=(n,),
        in_specs=in_specs,
        out_specs=tuple(out_specs),
        scratch_shapes=[pltpu.VMEM((hb, wb, cg), jnp.float32)],
        compiler_params=pltpu.CompilerParams(
            dimension_semantics=("parallel",),  # batch axis -> megacore
            vmem_limit_bytes=32 * 1024 * 1024),
    )(*ins)

    if stats_cout:
        slab, sums, sqs = outs
    else:
        slab = outs[0] if isinstance(outs, (list, tuple)) else outs
        sums = sqs = None
    return slab.reshape(n, ho, wo, c_total), sums, sqs


# --------------------------- PreActBlock forward -----------------------------

def preact_block_forward(x_nchw, params, stride, active_flag=True,
                         scale_constant=1.0, eps=1e-5):
    """Forward of the PyTorch PreActBlock (training-mode BatchNorm)."""
    if not active_flag:
        return x_nchw

    n, cin, h, w = x_nchw.shape
    s = stride
    planes = params["w1"].shape[3]

    # Fused NCHW -> cell-grouped NHWC: one XLA reshape/transpose puts channels
    # (x stride phases) on the lane axis and makes every strided conv tap a
    # static unit-stride slice inside the kernel.
    if s == 1:
        x_g = jnp.transpose(x_nchw, (0, 2, 3, 1))
    else:
        if h % s or w % s:
            raise NotImplementedError("spatial dims must be divisible by stride")
        x_g = jnp.transpose(
            x_nchw.reshape(n, cin, h // s, s, w // s, s),
            (0, 2, 4, 3, 5, 1)).reshape(n, h // s, w // s, s * s * cin)

    # bn1 batch statistics (one lane-dense reduction over the raw input).
    mean1, var1 = _channel_stats(x_g, cin)

    # Stage 1: relu(bn1(x)) -> conv1 (3x3, stride) fused with the optional 1x1
    # downsample (its columns concatenated onto conv1's matmul N axis), plus
    # bn2's batch statistics accumulated in the same kernel's epilogue.
    has_ds = "w_ds" in params
    weights = [params["w1"]] + ([params["w_ds"]] if has_ds else [])
    paddings = [1] + ([0] if has_ds else [])
    slab, sums, sqs = preact_fused_conv(
        x_g, cin, s, mean1, var1, params["bn1_gamma"], params["bn1_beta"],
        weights, paddings, stats_cout=planes, out_dtype=jnp.bfloat16, eps=eps)

    h1 = slab[..., :planes]
    # TODO(synk): read the shortcut columns straight from the stage-1 slab
    # inside the stage-2 kernel to skip this XLA split.
    shortcut = slab[..., planes:] if has_ds else x_g

    # bn2 statistics from the fused per-batch partials (no HBM re-read of h1).
    count = h1.shape[0] * h1.shape[1] * h1.shape[2]
    mean2 = jnp.sum(sums, axis=(0, 1)) / count
    var2 = jnp.maximum(jnp.sum(sqs, axis=(0, 1)) / count - mean2 * mean2, 0.0)

    # Stage 2: relu(bn2(h1)) -> conv2 (3x3, s=1) with scale_constant and the
    # residual add fused into the conv epilogue.
    out, _, _ = preact_fused_conv(
        h1, planes, 1, mean2, var2, params["bn2_gamma"], params["bn2_beta"],
        [params["w2"]], [1], out_scale=scale_constant, residual=shortcut,
        stats_cout=0, out_dtype=jnp.float32, eps=eps)

    return jnp.transpose(out, (0, 3, 1, 2))


# --------------------------- pure-JAX references ------------------------------

def _ref_forward_f32(x, params, stride, eps=1e-5, scale_constant=1.0):
    """Straight f32 transcription of the PyTorch module (the spec)."""
    def bn_relu(x, g, b):
        mean = x.mean(axis=(0, 2, 3), keepdims=True)
        var = ((x - mean) ** 2).mean(axis=(0, 2, 3), keepdims=True)
        y = (x - mean) * jax.lax.rsqrt(var + eps) * g.reshape(1, -1, 1, 1) \
            + b.reshape(1, -1, 1, 1)
        return jnp.maximum(y, 0.0)

    def conv(x, w, s, p):
        return jax.lax.conv_general_dilated(
            x, w, window_strides=(s, s), padding=[(p, p), (p, p)],
            dimension_numbers=("NCHW", "HWIO", "NCHW"))

    a1 = bn_relu(x, params["bn1_gamma"], params["bn1_beta"])
    shortcut = conv(a1, params["w_ds"], stride, 0) if "w_ds" in params else x
    h1 = conv(a1, params["w1"], stride, 1)
    out = conv(bn_relu(h1, params["bn2_gamma"], params["bn2_beta"]),
               params["w2"], 1, 1) * scale_constant
    return out + shortcut


def _ref_forward_bf16(x, params, stride, eps=1e-5, scale_constant=1.0):
    """Reference mirroring the kernel arithmetic: bf16 matmul operands with f32
    accumulation, bf16 intermediates, E[x^2]-mean^2 batch statistics."""
    def conv16(x, w, s, p):
        return jax.lax.conv_general_dilated(
            x.astype(jnp.bfloat16), w.astype(jnp.bfloat16),
            window_strides=(s, s), padding=[(p, p), (p, p)],
            dimension_numbers=("NCHW", "HWIO", "NCHW"),
            preferred_element_type=jnp.float32)

    def bn(x, g, b, mean, var):
        scale = g * jax.lax.rsqrt(var + eps)
        shift = b - mean * scale
        return x * scale.reshape(1, -1, 1, 1) + shift.reshape(1, -1, 1, 1)

    m1 = x.mean(axis=(0, 2, 3))
    v1 = jnp.maximum((x * x).mean(axis=(0, 2, 3)) - m1 * m1, 0.0)
    a1 = jnp.maximum(bn(x, params["bn1_gamma"], params["bn1_beta"], m1, v1), 0.0)
    h1 = conv16(a1, params["w1"], stride, 1)
    if "w_ds" in params:
        shortcut = conv16(a1, params["w_ds"], stride, 0).astype(jnp.bfloat16)
    else:
        shortcut = x
    m2 = h1.mean(axis=(0, 2, 3))
    v2 = jnp.maximum((h1 * h1).mean(axis=(0, 2, 3)) - m2 * m2, 0.0)
    h1_16 = h1.astype(jnp.bfloat16).astype(jnp.float32)
    a2 = jnp.maximum(bn(h1_16, params["bn2_gamma"], params["bn2_beta"], m2, v2),
                     0.0)
    out = conv16(a2, params["w2"], 1, 1) * scale_constant
    return out + shortcut.astype(jnp.float32)


# --------------------------- main ---------------------------------------------

if __name__ == "__main__":
    key = jax.random.PRNGKey(0)
    n, in_planes, planes, hh, ww, stride = 2, 4, 8, 16, 16, 2
    ks = jax.random.split(key, 8)

    x = jax.random.normal(ks[0], (n, in_planes, hh, ww), jnp.float32)
    params = {
        "bn1_gamma": 1.0 + 0.1 * jax.random.normal(ks[1], (in_planes,), jnp.float32),
        "bn1_beta": 0.1 * jax.random.normal(ks[2], (in_planes,), jnp.float32),
        "w1": 0.1 * jax.random.normal(ks[3], (3, 3, in_planes, planes), jnp.float32),
        "bn2_gamma": 1.0 + 0.1 * jax.random.normal(ks[4], (planes,), jnp.float32),
        "bn2_beta": 0.1 * jax.random.normal(ks[5], (planes,), jnp.float32),
        "w2": 0.1 * jax.random.normal(ks[6], (3, 3, planes, planes), jnp.float32),
        # stride != 1 and in_planes != planes -> downsample (1x1 conv, stride 2)
        "w_ds": 0.1 * jax.random.normal(ks[7], (1, 1, in_planes, planes), jnp.float32),
    }

    out = jax.block_until_ready(preact_block_forward(x, params, stride))

    ref16 = _ref_forward_bf16(x, params, stride)
    ref32 = _ref_forward_f32(x, params, stride)
    assert out.shape == ref32.shape == (n, planes, hh // stride, ww // stride)
    if not jnp.allclose(out, ref16, atol=5e-3, rtol=5e-3):
        raise AssertionError("Pallas PreActBlock mismatch vs bf16-matched reference")
    if not jnp.allclose(out, ref32, atol=1e-1, rtol=1e-1):
        raise AssertionError("Pallas PreActBlock mismatch vs f32 reference")

    print("KERNEL_OK")
</pallas_src>

<mosaic_0001>
module attributes {stable_mosaic.version = 11 : i64} {
  func.func @_bn_stats_kernel(%arg0: i32, %arg1: memref<16x128xf32, #tpu.memory_space<vmem>>, %arg2: memref<1x128xf32, #tpu.memory_space<vmem>>, %arg3: memref<1x128xf32, #tpu.memory_space<vmem>>) attributes {dimension_semantics = [#tpu.dimension_semantics<arbitrary>], iteration_bounds = array<i64: 1>, scalar_prefetch = 0 : i64, scratch_operands = 0 : i64, tpu.core_type = #tpu.core_type<tc>, window_params = [{transform_indices = @transform_0, window_bounds = array<i64: 16, 128>}, {pipeline_mode = #tpu.pipeline_mode<synchronous>, transform_indices = @transform_1, window_bounds = array<i64: 1, 128>}, {pipeline_mode = #tpu.pipeline_mode<synchronous>, transform_indices = @transform_2, window_bounds = array<i64: 1, 128>}]} {
    %c0_i32 = arith.constant 0 : i32
    %0 = arith.cmpi eq, %arg0, %c0_i32 : i32
    %1 = arith.extui %0 : i1 to i32
    %c0_i32_0 = arith.constant 0 : i32
    %2 = arith.cmpi ne, %1, %c0_i32_0 : i32
    scf.if %2 {
      %cst_11 = arith.constant 0.000000e+00 : f32
      %15 = vector.broadcast %cst_11 : f32 to vector<1x128xf32>
      %c0_12 = arith.constant 0 : index
      %c0_13 = arith.constant 0 : index
      %16 = vector.load %arg2[%c0_12, %c0_13] : memref<1x128xf32, #tpu.memory_space<vmem>>, vector<1x128xf32>
      tpu.vector_store %arg2[%c0_12, %c0_13], %15 {strides = array<i32>} : memref<1x128xf32, #tpu.memory_space<vmem>>, vector<1x128xf32>,
      %cst_14 = arith.constant 0.000000e+00 : f32
      %17 = vector.broadcast %cst_14 : f32 to vector<1x128xf32>
      %c0_15 = arith.constant 0 : index
      %c0_16 = arith.constant 0 : index
      %18 = vector.load %arg3[%c0_15, %c0_16] : memref<1x128xf32, #tpu.memory_space<vmem>>, vector<1x128xf32>
      tpu.vector_store %arg3[%c0_15, %c0_16], %17 {strides = array<i32>} : memref<1x128xf32, #tpu.memory_space<vmem>>, vector<1x128xf32>,
    } else {
    }
    %c0 = arith.constant 0 : index
    %c0_1 = arith.constant 0 : index
    %3 = vector.load %arg1[%c0, %c0_1] : memref<16x128xf32, #tpu.memory_space<vmem>>, vector<16x128xf32>
    %c0_2 = arith.constant 0 : index
    %c0_3 = arith.constant 0 : index
    %4 = vector.load %arg2[%c0_2, %c0_3] : memref<1x128xf32, #tpu.memory_space<vmem>>, vector<1x128xf32>
    %cst = arith.constant dense<0.000000e+00> : vector<128xf32>
    %5 = vector.multi_reduction <add>, %3, %cst [0] : vector<16x128xf32> to vector<128xf32>
    %6 = vector.shape_cast %5 : vector<128xf32> to vector<1x128xf32>
    %7 = arith.addf %4, %6 : vector<1x128xf32>
    %c0_4 = arith.constant 0 : index
    %c0_5 = arith.constant 0 : index
    %8 = vector.load %arg2[%c0_4, %c0_5] : memref<1x128xf32, #tpu.memory_space<vmem>>, vector<1x128xf32>
    tpu.vector_store %arg2[%c0_4, %c0_5], %7 {strides = array<i32>} : memref<1x128xf32, #tpu.memory_space<vmem>>, vector<1x128xf32>,
    %c0_6 = arith.constant 0 : index
    %c0_7 = arith.constant 0 : index
    %9 = vector.load %arg3[%c0_6, %c0_7] : memref<1x128xf32, #tpu.memory_space<vmem>>, vector<1x128xf32>
    %10 = arith.mulf %3, %3 : vector<16x128xf32>
    %cst_8 = arith.constant dense<0.000000e+00> : vector<128xf32>
    %11 = vector.multi_reduction <add>, %10, %cst_8 [0] : vector<16x128xf32> to vector<128xf32>
    %12 = vector.shape_cast %11 : vector<128xf32> to vector<1x128xf32>
    %13 = arith.addf %9, %12 : vector<1x128xf32>
    %c0_9 = arith.constant 0 : index
    %c0_10 = arith.constant 0 : index
    %14 = vector.load %arg3[%c0_9, %c0_10] : memref<1x128xf32, #tpu.memory_space<vmem>>, vector<1x128xf32>
    tpu.vector_store %arg3[%c0_9, %c0_10], %13 {strides = array<i32>} : memref<1x128xf32, #tpu.memory_space<vmem>>, vector<1x128xf32>,
    return
  }
  func.func @transform_0(%arg0: i32) -> (i32, i32) {
    %c0_i32 = arith.constant 0 : i32
    %c0_i32_0 = arith.constant 0 : i32
    return %arg0, %c0_i32 : i32, i32
  }
  func.func @transform_1(%arg0: i32) -> (i32, i32) {
    %c0_i32 = arith.constant 0 : i32
    %c0_i32_0 = arith.constant 0 : i32
    %c0_i32_1 = arith.constant 0 : i32
    return %c0_i32, %c0_i32_0 : i32, i32
  }
  func.func @transform_2(%arg0: i32) -> (i32, i32) {
    %c0_i32 = arith.constant 0 : i32
    %c0_i32_0 = arith.constant 0 : i32
    %c0_i32_1 = arith.constant 0 : i32
    return %c0_i32, %c0_i32_0 : i32, i32
  }
}

</mosaic_0001>

<llo_original>
// kernel: tpu_custom_call.1
$region0: #{tpu_custom_call.1}
  #allocation0 [shape = 'u32[]', space=smem, size = 0x4, offset = 0x4, fixed_abs, tag = 'smem constant byte address 0x4 - core index']
  #allocation1 [shape = 'u32[144,128]{1,0:T(1,128)}', space=vmem, size = 0x12000, scoped, tag = 'internal scratch']
  %s0 = inlined_call_operand.hbm [shape: f32[16,128], index: 0, kind: input, shape index: {}]
  %s1 = inlined_call_operand.hbm [shape: f32[1,128], index: 1, kind: output, shape index: {0}]
  %s2 = inlined_call_operand.hbm [shape: f32[1,128], index: 2, kind: output, shape index: {1}]
  %3 = xla_tuple %s1, %s2
  %s4 = sld [smem:[#allocation0]]
  $region30: #{tpu_custom_call.1} parent=0
    _
  %s6 = ssub.s32 1, %s4
  %s7 = scalar_select 0, %s6, %s4
  $region1: #{tpu_custom_call.1} parent=0
    #allocation2 [shape = 'u8[8192]{0}', space=vmem, size = 0x2000, scoped, tag = 'input window, operand 0, single buffered']
    #allocation3 [shape = 's32[1]{0}', space=sflag, size = 0x4, scoped, tag = 'scoped memory for tpu_custom_call.1']
    #allocation4 [shape = 's32[1]{0}', space=sflag, size = 0x4, scoped, tag = 'scoped memory for tpu_custom_call.1']
    #allocation5 [shape = 'u8[512]{0}', space=vmem, size = 0x400, scoped, tag = 'output window, operand 0, single buffered']
    #allocation6 [shape = 'u8[512]{0}', space=vmem, size = 0x400, scoped, tag = 'output window, operand 1, single buffered']
    #allocation7 [shape = 's32[1]{0}', space=sflag, size = 0x4, scoped, tag = 'scoped memory for tpu_custom_call.1']
    %8 = vsyncpa [#allocation3], 0
    %9 = vsyncpa [#allocation4], 0
    %10 = vsyncpa [#allocation7], 0
    // Predicated region
    $region2: #{tpu_custom_call.1} parent=1 // pred_check
      _
    $region3: #{tpu_custom_call.1} parent=1 // pred_check_branch
      %12 = sbr.rel (0) target = $region5
    $region4: #{tpu_custom_call.1} parent=1 // pred_region
      %s14 = ssub.s32 256, 256
      %15 = vsyncadd [#allocation3], %s14
      %s16 = sshll.u32 [#allocation2], 4
      %s17 = int_to_ptr.vmem [resolvable:$true] %s16
      %22 = dma.hbm_to_vmem [thread:$0]  %s0, 256, %s17, [#allocation3], 128, 128, 8
    $region5: #{tpu_custom_call.1} parent=1 // pred_fallthru
      _
    // Predicated region
    $region6: #{tpu_custom_call.1} parent=1 // pred_check
      _
    $region7: #{tpu_custom_call.1} parent=1 // pred_check_branch
      %24 = sbr.rel (0) target = $region9
    $region8: #{tpu_custom_call.1} parent=1 // pred_region
      %25 = dma.done [#allocation3], 256
    $region9: #{tpu_custom_call.1} parent=1 // pred_fallthru
      _
    %p26 = scmp.eq.s32.totalorder 0, 0
    // Predicated region
    $region10: #{tpu_custom_call.1} parent=1 // pred_check
      %p27 = pneg %p26
    $region11: #{tpu_custom_call.1} parent=1 // pred_check_branch
      %29 = sbr.rel (%p27) target = $region13
    $region12: #{tpu_custom_call.1} parent=1 // pred_region
      %30 = vst [vmem:[#allocation5] sm:$0x1] 0.0
      %31 = vst [vmem:[#allocation6] sm:$0x1] 0.0
    $region13: #{tpu_custom_call.1} parent=1 // pred_fallthru
      _
    %v32 = vld [vmem:[#allocation2] sm:$0xff]
    %v33 = vld [vmem:[#allocation2 + $0x8] sm:$0xff]
    %v34 = vld [vmem:[#allocation5] sm:$0x1]
    %v35 = vadd.f32 %v32, %v33
    %v36 = vrot.slane %v35, 4
    %v37 = vadd.f32 %v35, %v36
    %v38 = vrot.slane %v37, 2
    %v39 = vadd.f32 %v37, %v38
    %v40 = vrot.slane %v39, 1
    %v41 = vadd.f32 %v39, %v40
    %v42 = vadd.f32 %v34, %v41
    %43 = vst [vmem:[#allocation5] sm:$0x1] %v42
    %v44 = vld [vmem:[#allocation6] sm:$0x1]
    %v45 = vmul.f32 %v32, %v32
    %v46 = vmul.f32 %v33, %v33
    %v47 = vadd.f32 %v45, %v46
    %v48 = vrot.slane %v47, 4
    %v49 = vadd.f32 %v47, %v48
    %v50 = vrot.slane %v49, 2
    %v51 = vadd.f32 %v49, %v50
    %v52 = vrot.slane %v51, 1
    %v53 = vadd.f32 %v51, %v52
    %v54 = vadd.f32 %v44, %v53
    %55 = vst [vmem:[#allocation6] sm:$0x1] %v54
    // Predicated region
    $region14: #{tpu_custom_call.1} parent=1 // pred_check
      _
    $region15: #{tpu_custom_call.1} parent=1 // pred_check_branch
      %57 = sbr.rel (0) target = $region17
    $region16: #{tpu_custom_call.1} parent=1 // pred_region
      %s59 = ssub.s32 16, 16
      %60 = vsyncadd [#allocation4], %s59
      %s62 = sshll.u32 [#allocation5], 4
      %s63 = int_to_ptr.vmem [resolvable:$true] %s62
      %65 = dma.vmem_to_hbm [thread:$0]  %s63, 16, %s1, [#allocation4]
    $region17: #{tpu_custom_call.1} parent=1 // pred_fallthru
      _
    // Predicated region
    $region18: #{tpu_custom_call.1} parent=1 // pred_check
      _
    $region19: #{tpu_custom_call.1} parent=1 // pred_check_branch
      %67 = sbr.rel (0) target = $region21
    $region20: #{tpu_custom_call.1} parent=1 // pred_region
      %s69 = ssub.s32 16, 16
      %70 = vsyncadd [#allocation7], %s69
      %s72 = sshll.u32 [#allocation6], 4
      %s73 = int_to_ptr.vmem [resolvable:$true] %s72
      %75 = dma.vmem_to_hbm [thread:$0]  %s73, 16, %s2, [#allocation7]
    $region21: #{tpu_custom_call.1} parent=1 // pred_fallthru
      _
    // Predicated region
    $region22: #{tpu_custom_call.1} parent=1 // pred_check
      _
    $region23: #{tpu_custom_call.1} parent=1 // pred_check_branch
      %77 = sbr.rel (0) target = $region25
    $region24: #{tpu_custom_call.1} parent=1 // pred_region
      %78 = dma.done [#allocation4], 16
    $region25: #{tpu_custom_call.1} parent=1 // pred_fallthru
      _
    // Predicated region
    $region26: #{tpu_custom_call.1} parent=1 // pred_check
      _
    $region27: #{tpu_custom_call.1} parent=1 // pred_check_branch
      %80 = sbr.rel (0) target = $region29
    $region28: #{tpu_custom_call.1} parent=1 // pred_region
      %81 = dma.done [#allocation7], 16
    $region29: #{tpu_custom_call.1} parent=1 // pred_fallthru
      _
    %82 = vsyncpa [#allocation3], 1
    %83 = vsyncpa [#allocation4], 1
    %84 = vsyncpa [#allocation7], 1

</llo_original>
